<compile_context>
chip_gen: v6e
topology: v6e:2x2x1
jax: 0.10.0
libtpu: 0.0.40
codegen_flags: <defaults>
</compile_context>

<pallas_src>
import functools

import numpy as np
import jax
import jax.numpy as jnp
from jax import lax
from jax.experimental import pallas as pl
from jax.experimental.pallas import tpu as pltpu


# ----------------------------------------------------------------------------
# Kernels
# ----------------------------------------------------------------------------
def _write_sums(xr, xi, o_ref):
    """Direct row writes (no sublane concatenate -> no vreg relayout)."""
    o_ref[0:1, :] = jnp.sum(xr, axis=0, keepdims=True)
    o_ref[1:2, :] = jnp.sum(xr * xr, axis=0, keepdims=True)
    o_ref[2:3, :] = jnp.sum(xi, axis=0, keepdims=True)
    o_ref[3:4, :] = jnp.sum(xi * xi, axis=0, keepdims=True)


def _stats_kernel(xr_ref, xi_ref, o_ref, *, block_rows, total_rows):
    """Per-lane sum / sum-of-squares partials for one row tile.

    xr_ref, xi_ref : (block_rows, lanes) f32
    o_ref          : (4, lanes) f32  -> [sum_r, sumsq_r, sum_i, sumsq_i]
    """
    rem = total_rows % block_rows          # static Python int
    if rem == 0:
        # No tail tile -> no masking anywhere: pure loads + sums.
        _write_sums(xr_ref[...], xi_ref[...], o_ref)
    else:
        is_last = pl.program_id(0) == pl.num_programs(0) - 1

        @pl.when(jnp.logical_not(is_last))
        def _():
            _write_sums(xr_ref[...], xi_ref[...], o_ref)

        @pl.when(is_last)
        def _():
            # Narrow (block_rows, 1) iota; broadcast in the select.
            valid = lax.broadcasted_iota(jnp.int32, (block_rows, 1), 0) < rem
            xr = jnp.where(valid, xr_ref[...], 0.0)
            xi = jnp.where(valid, xi_ref[...], 0.0)
            _write_sums(xr, xi, o_ref)


def _norm_kernel(xr_ref, xi_ref, sc_ref, sh_ref, or_ref, oi_ref):
    """y = x * scale + shift per part, fully lane-dense VPU work.

    xr_ref/xi_ref/or_ref/oi_ref : (block_rows, lanes) f32
    sc_ref/sh_ref               : (2, lanes) f32, row 0 = real, row 1 = imag

    Note: rows of a partial final tile compute on padded garbage; Pallas drops
    the out-of-extent portion of the output block, so this is correct.
    """
    or_ref[...] = xr_ref[...] * sc_ref[0:1, :] + sh_ref[0:1, :]
    oi_ref[...] = xi_ref[...] * sc_ref[1:2, :] + sh_ref[1:2, :]


# ----------------------------------------------------------------------------
# Tiling / VMEM sizing
# ----------------------------------------------------------------------------
def _vmem_capacity_bytes():
    try:
        return int(pltpu.get_tpu_info().vmem_capacity_bytes)
    except Exception:
        return 64 * 1024 * 1024            # conservative: assume v7x (smallest)


def _pick_tiling(n_rows, n_lanes, requested=None):
    """Row tile + explicit VMEM limit.

    The norm pass holds 2 inputs + 2 outputs, double-buffered = 8 live plane
    tiles; budget ~3/4 of physical VMEM for them, capped at 8 MiB per tile
    (=> ~64 MiB live on v5e/v6e, ~48 MiB on v7x).
    """
    cap = _vmem_capacity_bytes()
    per_tile_budget = min(8 * 1024 * 1024, (3 * cap) // 32)

    if requested is None:
        rows = max(8, per_tile_budget // max(4 * n_lanes, 1))
    else:
        rows = max(1, int(requested))

    if rows >= n_rows:
        if n_rows >= 16:
            # Keep >=2 row tiles so the "parallel" grid axis shards across
            # both TensorCores on v7x.
            rows = ((n_rows + 1) // 2 + 7) // 8 * 8
            rows = min(rows, n_rows)
        else:
            rows = n_rows                  # full extent (ok even if < 8)
    else:
        rows = max(8, (rows // 8) * 8)     # second-minor dim: multiple of 8
        rows = min(rows, n_rows)

    tile_bytes = rows * n_lanes * 4
    needed = 8 * tile_bytes + 4 * n_lanes * 4 * 4 + (4 << 20)   # tiles+maps+slack
    vmem_limit = int(min(cap, max(needed, 32 << 20)))
    return rows, vmem_limit


# ----------------------------------------------------------------------------
# pallas_call wrappers
# ----------------------------------------------------------------------------
@functools.partial(jax.jit, static_argnames=("block_rows", "vmem_limit_bytes"))
def _compute_batch_sums(xr2, xi2, block_rows, vmem_limit_bytes):
    """Returns (4, lanes): per-lane [sum_r, sumsq_r, sum_i, sumsq_i]."""
    n_rows, n_lanes = xr2.shape
    tn = block_rows
    g = pl.cdiv(n_rows, tn)
    partial = pl.pallas_call(
        functools.partial(_stats_kernel, block_rows=tn, total_rows=n_rows),
        out_shape=jax.ShapeDtypeStruct((g, 4, n_lanes), jnp.float32),
        grid=(g,),
        in_specs=[
            pl.BlockSpec((tn, n_lanes), lambda i: (i, 0)),
            pl.BlockSpec((tn, n_lanes), lambda i: (i, 0)),
        ],
        out_specs=pl.BlockSpec((None, 4, n_lanes), lambda i: (i, 0, 0)),
        compiler_params=pltpu.CompilerParams(
            dimension_semantics=("parallel",),
            vmem_limit_bytes=vmem_limit_bytes,
        ),
        cost_estimate=pl.CostEstimate(
            flops=6 * n_rows * n_lanes,
            transcendentals=0,
            bytes_accessed=(2 * n_rows * n_lanes + g * 4 * n_lanes) * 4,
        ),
    )(xr2, xi2)
    return jnp.sum(partial, axis=0)


@functools.partial(jax.jit, static_argnames=("block_rows", "vmem_limit_bytes"))
def _apply_scale_shift(xr2, xi2, scale_map, shift_map, block_rows,
                       vmem_limit_bytes):
    """Elementwise affine normalization for both parts."""
    n_rows, n_lanes = xr2.shape
    tn = block_rows
    g = pl.cdiv(n_rows, tn)
    return pl.pallas_call(
        _norm_kernel,
        out_shape=(
            jax.ShapeDtypeStruct((n_rows, n_lanes), jnp.float32),
            jax.ShapeDtypeStruct((n_rows, n_lanes), jnp.float32),
        ),
        grid=(g,),
        in_specs=[
            pl.BlockSpec((tn, n_lanes), lambda i: (i, 0)),
            pl.BlockSpec((tn, n_lanes), lambda i: (i, 0)),
            pl.BlockSpec((2, n_lanes), lambda i: (0, 0)),   # resident in VMEM
            pl.BlockSpec((2, n_lanes), lambda i: (0, 0)),   # resident in VMEM
        ],
        out_specs=(
            pl.BlockSpec((tn, n_lanes), lambda i: (i, 0)),
            pl.BlockSpec((tn, n_lanes), lambda i: (i, 0)),
        ),
        compiler_params=pltpu.CompilerParams(
            dimension_semantics=("parallel",),
            vmem_limit_bytes=vmem_limit_bytes,
        ),
        cost_estimate=pl.CostEstimate(
            flops=4 * n_rows * n_lanes,
            transcendentals=0,
            bytes_accessed=(4 * n_rows * n_lanes + 4 * n_lanes) * 4,
        ),
    )(xr2, xi2, scale_map, shift_map)


# ----------------------------------------------------------------------------
# Module
# ----------------------------------------------------------------------------
class cBatchNorm1d:
    """JAX/Pallas port of the PyTorch cBatchNorm1d module (forward pass)."""

    def __init__(self, num_features, eps=1e-05, momentum=0.1, affine=True,
                 track_running_stats=True, block_rows=None):
        self.num_features = int(num_features)
        self.eps = float(eps)
        self.momentum = float(momentum)
        self.affine = bool(affine)
        self.track_running_stats = bool(track_running_stats)
        self.block_rows = block_rows
        self.training = True

        C = self.num_features
        if self.affine:
            self.gamma_r = jnp.ones((C,), jnp.float32)
            self.beta_r = jnp.zeros((C,), jnp.float32)
            self.gamma_i = jnp.ones((C,), jnp.float32)
            self.beta_i = jnp.zeros((C,), jnp.float32)
        if self.track_running_stats:
            self.running_mean_r = jnp.zeros((C,), jnp.float32)
            self.running_var_r = jnp.ones((C,), jnp.float32)
            self.running_mean_i = jnp.zeros((C,), jnp.float32)
            self.running_var_i = jnp.ones((C,), jnp.float32)

    def __call__(self, inp):
        x = jnp.asarray(inp)
        squeeze = False
        if x.ndim == 2:                       # (N, C) -> (N, C, 1), like BatchNorm1d
            x = x[:, :, None]
            squeeze = True
        if x.ndim != 3:
            raise ValueError("cBatchNorm1d expects (N, C) or (N, C, L) input")
        N, C, L = x.shape
        if C != self.num_features:
            raise ValueError("channel mismatch")

        # Split into real/imag float32 planes; fold (C, L) into the lane axis
        # (free, contiguous reshape) so all kernel traffic is lane-dense.
        lanes = C * L
        lanes_pad = max(128, ((lanes + 127) // 128) * 128)
        real = jnp.real(x).astype(jnp.float32).reshape(N, lanes)
        imag = jnp.imag(x).astype(jnp.float32).reshape(N, lanes)
        if lanes_pad != lanes:
            # Zero lane padding -> unmasked vector loads/stores in the kernels;
            # pad lanes contribute nothing to the sums and are sliced off below.
            pad = ((0, 0), (0, lanes_pad - lanes))
            real = jnp.pad(real, pad)
            imag = jnp.pad(imag, pad)

        tn, vmem_limit = _pick_tiling(N, lanes_pad, self.block_rows)
        use_batch_stats = self.training or not self.track_running_stats

        if use_batch_stats:
            sums = _compute_batch_sums(real, imag, tn, vmem_limit)   # (4, lanes_pad)
            per_ch = jnp.sum(sums[:, :lanes].reshape(4, C, L), axis=-1)  # (4, C)
            cnt = jnp.float32(N * L)
            mean_r = per_ch[0] / cnt
            var_r = jnp.maximum(per_ch[1] / cnt - mean_r * mean_r, 0.0)
            mean_i = per_ch[2] / cnt
            var_i = jnp.maximum(per_ch[3] / cnt - mean_i * mean_i, 0.0)
            if self.track_running_stats:
                n = N * L
                unbias = float(n) / float(max(n - 1, 1))
                m = self.momentum
                self.running_mean_r = (1 - m) * self.running_mean_r + m * mean_r
                self.running_var_r = (1 - m) * self.running_var_r + m * var_r * unbias
                self.running_mean_i = (1 - m) * self.running_mean_i + m * mean_i
                self.running_var_i = (1 - m) * self.running_var_i + m * var_i * unbias
        else:
            mean_r, var_r = self.running_mean_r, self.running_var_r
            mean_i, var_i = self.running_mean_i, self.running_var_i

        rstd_r = lax.rsqrt(var_r + self.eps)
        rstd_i = lax.rsqrt(var_i + self.eps)
        if self.affine:
            g_r, b_r, g_i, b_i = self.gamma_r, self.beta_r, self.gamma_i, self.beta_i
        else:
            g_r = g_i = jnp.ones((C,), jnp.float32)
            b_r = b_i = jnp.zeros((C,), jnp.float32)

        scale_r = g_r * rstd_r
        shift_r = b_r - mean_r * scale_r
        scale_i = g_i * rstd_i
        shift_i = b_i - mean_i * scale_i

        # Per-lane maps matching the (N, C*L) flattening: lane c*L + l -> channel c.
        def lane_map(v_r, v_i):
            m = jnp.stack([jnp.repeat(v_r, L), jnp.repeat(v_i, L)], axis=0)
            if lanes_pad != lanes:
                m = jnp.pad(m, ((0, 0), (0, lanes_pad - lanes)))
            return m

        scale_map = lane_map(scale_r, scale_i)
        shift_map = lane_map(shift_r, shift_i)

        out_r, out_i = _apply_scale_shift(real, imag, scale_map, shift_map,
                                          tn, vmem_limit)
        out_r = out_r[:, :lanes].reshape(N, C, L)
        out_i = out_i[:, :lanes].reshape(N, C, L)
        out = lax.complex(out_r, out_i)
        if squeeze:
            out = out[:, :, 0]
        return out


# ----------------------------------------------------------------------------
# Demo / self-test
# ----------------------------------------------------------------------------
if __name__ == "__main__":
    # Small (N, C, L), N chosen so the last row tile is partial (exercises the
    # pl.when tail mask) and C*L=64 exercises the lane-padding path.
    N, C, L = 20, 4, 16

    key = jax.random.PRNGKey(0)
    kr, ki = jax.random.split(key)
    real = jax.random.normal(kr, (N, C, L), dtype=jnp.float32) * 2.0 + 0.5
    imag = jax.random.normal(ki, (N, C, L), dtype=jnp.float32) * 0.7 - 1.0
    x = (real + 1j * imag).astype(jnp.complex64)

    bn = cBatchNorm1d(C)
    # Non-trivial affine parameters to exercise the gamma/beta path.
    bn.gamma_r = 1.0 + 0.10 * jnp.arange(C, dtype=jnp.float32)
    bn.beta_r = 0.05 * jnp.arange(C, dtype=jnp.float32)
    bn.gamma_i = 1.0 - 0.05 * jnp.arange(C, dtype=jnp.float32)
    bn.beta_i = -0.02 * jnp.arange(C, dtype=jnp.float32)

    out = bn(x)
    out = jax.block_until_ready(out)

    # Host-side reference (training-mode BatchNorm1d per part, biased variance).
    def ref_bn(v, g, b, eps=1e-5):
        m = v.mean(axis=(0, 2), keepdims=True)
        var = v.var(axis=(0, 2), keepdims=True)
        return (v - m) / np.sqrt(var + eps) * np.asarray(g)[None, :, None] \
            + np.asarray(b)[None, :, None]

    xr = np.asarray(real)
    xi = np.asarray(imag)
    ref = ref_bn(xr, bn.gamma_r, bn.beta_r) + 1j * ref_bn(xi, bn.gamma_i, bn.beta_i)
    np.testing.assert_allclose(np.asarray(out), ref.astype(np.complex64),
                               rtol=2e-4, atol=2e-4)

    print("KERNEL_OK")
</pallas_src>

<mosaic_0001>
module attributes {stable_mosaic.version = 11 : i64} {
  func.func @_stats_kernel(%arg0: i32, %arg1: memref<16x128xf32, #tpu.memory_space<vmem>>, %arg2: memref<16x128xf32, #tpu.memory_space<vmem>>, %arg3: memref<1x4x128xf32, #tpu.memory_space<vmem>>) attributes {dimension_semantics = [#tpu.dimension_semantics<parallel>], iteration_bounds = array<i64: 2>, scalar_prefetch = 0 : i64, scratch_operands = 0 : i64, tpu.core_type = #tpu.core_type<tc>, window_params = [{transform_indices = @transform_0, window_bounds = array<i64: 16, 128>}, {transform_indices = @transform_1, window_bounds = array<i64: 16, 128>}, {transform_indices = @transform_2, window_bounds = array<i64: 1, 4, 128>}]} {
    %c1_i32 = arith.constant 1 : i32
    %0 = arith.cmpi eq, %arg0, %c1_i32 : i32
    %true = arith.constant true
    %1 = arith.xori %0, %true : i1
    %2 = arith.extui %1 : i1 to i32
    %c0_i32 = arith.constant 0 : i32
    %3 = arith.cmpi ne, %2, %c0_i32 : i32
    scf.if %3 {
      %c0 = arith.constant 0 : index
      %c0_1 = arith.constant 0 : index
      %6 = vector.load %arg1[%c0, %c0_1] : memref<16x128xf32, #tpu.memory_space<vmem>>, vector<16x128xf32>
      %c0_2 = arith.constant 0 : index
      %c0_3 = arith.constant 0 : index
      %7 = vector.load %arg2[%c0_2, %c0_3] : memref<16x128xf32, #tpu.memory_space<vmem>>, vector<16x128xf32>
      %cst = arith.constant dense<0.000000e+00> : vector<128xf32>
      %8 = vector.multi_reduction <add>, %6, %cst [0] : vector<16x128xf32> to vector<128xf32>
      %9 = vector.shape_cast %8 : vector<128xf32> to vector<1x128xf32>
      %c0_4 = arith.constant 0 : index
      %c0_5 = arith.constant 0 : index
      %c0_6 = arith.constant 0 : index
      %10 = vector.load %arg3[%c0_4, %c0_5, %c0_6] : memref<1x4x128xf32, #tpu.memory_space<vmem>>, vector<1x1x128xf32>
      %11 = vector.shape_cast %10 : vector<1x1x128xf32> to vector<1x128xf32>
      %12 = vector.shape_cast %9 : vector<1x128xf32> to vector<1x1x128xf32>
      tpu.vector_store %arg3[%c0_4, %c0_5, %c0_6], %12 {strides = array<i32>} : memref<1x4x128xf32, #tpu.memory_space<vmem>>, vector<1x1x128xf32>,
      %13 = arith.mulf %6, %6 : vector<16x128xf32>
      %cst_7 = arith.constant dense<0.000000e+00> : vector<128xf32>
      %14 = vector.multi_reduction <add>, %13, %cst_7 [0] : vector<16x128xf32> to vector<128xf32>
      %15 = vector.shape_cast %14 : vector<128xf32> to vector<1x128xf32>
      %c0_8 = arith.constant 0 : index
      %c1 = arith.constant 1 : index
      %c0_9 = arith.constant 0 : index
      %16 = vector.load %arg3[%c0_8, %c1, %c0_9] : memref<1x4x128xf32, #tpu.memory_space<vmem>>, vector<1x1x128xf32>
      %17 = vector.shape_cast %16 : vector<1x1x128xf32> to vector<1x128xf32>
      %18 = vector.shape_cast %15 : vector<1x128xf32> to vector<1x1x128xf32>
      tpu.vector_store %arg3[%c0_8, %c1, %c0_9], %18 {strides = array<i32>} : memref<1x4x128xf32, #tpu.memory_space<vmem>>, vector<1x1x128xf32>,
      %cst_10 = arith.constant dense<0.000000e+00> : vector<128xf32>
      %19 = vector.multi_reduction <add>, %7, %cst_10 [0] : vector<16x128xf32> to vector<128xf32>
      %20 = vector.shape_cast %19 : vector<128xf32> to vector<1x128xf32>
      %c0_11 = arith.constant 0 : index
      %c2 = arith.constant 2 : index
      %c0_12 = arith.constant 0 : index
      %21 = vector.load %arg3[%c0_11, %c2, %c0_12] : memref<1x4x128xf32, #tpu.memory_space<vmem>>, vector<1x1x128xf32>
      %22 = vector.shape_cast %21 : vector<1x1x128xf32> to vector<1x128xf32>
      %23 = vector.shape_cast %20 : vector<1x128xf32> to vector<1x1x128xf32>
      tpu.vector_store %arg3[%c0_11, %c2, %c0_12], %23 {strides = array<i32>} : memref<1x4x128xf32, #tpu.memory_space<vmem>>, vector<1x1x128xf32>,
      %24 = arith.mulf %7, %7 : vector<16x128xf32>
      %cst_13 = arith.constant dense<0.000000e+00> : vector<128xf32>
      %25 = vector.multi_reduction <add>, %24, %cst_13 [0] : vector<16x128xf32> to vector<128xf32>
      %26 = vector.shape_cast %25 : vector<128xf32> to vector<1x128xf32>
      %c0_14 = arith.constant 0 : index
      %c3 = arith.constant 3 : index
      %c0_15 = arith.constant 0 : index
      %27 = vector.load %arg3[%c0_14, %c3, %c0_15] : memref<1x4x128xf32, #tpu.memory_space<vmem>>, vector<1x1x128xf32>
      %28 = vector.shape_cast %27 : vector<1x1x128xf32> to vector<1x128xf32>
      %29 = vector.shape_cast %26 : vector<1x128xf32> to vector<1x1x128xf32>
      tpu.vector_store %arg3[%c0_14, %c3, %c0_15], %29 {strides = array<i32>} : memref<1x4x128xf32, #tpu.memory_space<vmem>>, vector<1x1x128xf32>,
    } else {
    }
    %4 = arith.extui %0 : i1 to i32
    %c0_i32_0 = arith.constant 0 : i32
    %5 = arith.cmpi ne, %4, %c0_i32_0 : i32
    scf.if %5 {
      %6 = tpu.iota {dimensions = array<i32: 0>} : vector<16x1xi32>
      %c4_i32 = arith.constant 4 : i32
      %7 = vector.broadcast %c4_i32 : i32 to vector<16x1xi32>
      %8 = arith.cmpi slt, %6, %7 : vector<16x1xi32>
      %c0 = arith.constant 0 : index
      %c0_1 = arith.constant 0 : index
      %9 = vector.load %arg1[%c0, %c0_1] : memref<16x128xf32, #tpu.memory_space<vmem>>, vector<16x128xf32>
      %cst = arith.constant 0.000000e+00 : f32
      %10 = vector.shape_cast %8 : vector<16x1xi1> to vector<16x1xi1>
      %11 = vector.broadcast %10 : vector<16x1xi1> to vector<16x128xi1>
      %12 = vector.broadcast %cst : f32 to vector<16x128xf32>
      %13 = arith.select %11, %9, %12 : vector<16x128xi1>, vector<16x128xf32>
      %c0_2 = arith.constant 0 : index
      %c0_3 = arith.constant 0 : index
      %14 = vector.load %arg2[%c0_2, %c0_3] : memref<16x128xf32, #tpu.memory_space<vmem>>, vector<16x128xf32>
      %cst_4 = arith.constant 0.000000e+00 : f32
      %15 = vector.shape_cast %8 : vector<16x1xi1> to vector<16x1xi1>
      %16 = vector.broadcast %15 : vector<16x1xi1> to vector<16x128xi1>
      %17 = vector.broadcast %cst_4 : f32 to vector<16x128xf32>
      %18 = arith.select %16, %14, %17 : vector<16x128xi1>, vector<16x128xf32>
      %cst_5 = arith.constant dense<0.000000e+00> : vector<128xf32>
      %19 = vector.multi_reduction <add>, %13, %cst_5 [0] : vector<16x128xf32> to vector<128xf32>
      %20 = vector.shape_cast %19 : vector<128xf32> to vector<1x128xf32>
      %c0_6 = arith.constant 0 : index
      %c0_7 = arith.constant 0 : index
      %c0_8 = arith.constant 0 : index
      %21 = vector.load %arg3[%c0_6, %c0_7, %c0_8] : memref<1x4x128xf32, #tpu.memory_space<vmem>>, vector<1x1x128xf32>
      %22 = vector.shape_cast %21 : vector<1x1x128xf32> to vector<1x128xf32>
      %23 = vector.shape_cast %20 : vector<1x128xf32> to vector<1x1x128xf32>
      tpu.vector_store %arg3[%c0_6, %c0_7, %c0_8], %23 {strides = array<i32>} : memref<1x4x128xf32, #tpu.memory_space<vmem>>, vector<1x1x128xf32>,
      %24 = arith.mulf %13, %13 : vector<16x128xf32>
      %cst_9 = arith.constant dense<0.000000e+00> : vector<128xf32>
      %25 = vector.multi_reduction <add>, %24, %cst_9 [0] : vector<16x128xf32> to vector<128xf32>
      %26 = vector.shape_cast %25 : vector<128xf32> to vector<1x128xf32>
      %c0_10 = arith.constant 0 : index
      %c1 = arith.constant 1 : index
      %c0_11 = arith.constant 0 : index
      %27 = vector.load %arg3[%c0_10, %c1, %c0_11] : memref<1x4x128xf32, #tpu.memory_space<vmem>>, vector<1x1x128xf32>
      %28 = vector.shape_cast %27 : vector<1x1x128xf32> to vector<1x128xf32>
      %29 = vector.shape_cast %26 : vector<1x128xf32> to vector<1x1x128xf32>
      tpu.vector_store %arg3[%c0_10, %c1, %c0_11], %29 {strides = array<i32>} : memref<1x4x128xf32, #tpu.memory_space<vmem>>, vector<1x1x128xf32>,
      %cst_12 = arith.constant dense<0.000000e+00> : vector<128xf32>
      %30 = vector.multi_reduction <add>, %18, %cst_12 [0] : vector<16x128xf32> to vector<128xf32>
      %31 = vector.shape_cast %30 : vector<128xf32> to vector<1x128xf32>
      %c0_13 = arith.constant 0 : index
      %c2 = arith.constant 2 : index
      %c0_14 = arith.constant 0 : index
      %32 = vector.load %arg3[%c0_13, %c2, %c0_14] : memref<1x4x128xf32, #tpu.memory_space<vmem>>, vector<1x1x128xf32>
      %33 = vector.shape_cast %32 : vector<1x1x128xf32> to vector<1x128xf32>
      %34 = vector.shape_cast %31 : vector<1x128xf32> to vector<1x1x128xf32>
      tpu.vector_store %arg3[%c0_13, %c2, %c0_14], %34 {strides = array<i32>} : memref<1x4x128xf32, #tpu.memory_space<vmem>>, vector<1x1x128xf32>,
      %35 = arith.mulf %18, %18 : vector<16x128xf32>
      %cst_15 = arith.constant dense<0.000000e+00> : vector<128xf32>
      %36 = vector.multi_reduction <add>, %35, %cst_15 [0] : vector<16x128xf32> to vector<128xf32>
      %37 = vector.shape_cast %36 : vector<128xf32> to vector<1x128xf32>
      %c0_16 = arith.constant 0 : index
      %c3 = arith.constant 3 : index
      %c0_17 = arith.constant 0 : index
      %38 = vector.load %arg3[%c0_16, %c3, %c0_17] : memref<1x4x128xf32, #tpu.memory_space<vmem>>, vector<1x1x128xf32>
      %39 = vector.shape_cast %38 : vector<1x1x128xf32> to vector<1x128xf32>
      %40 = vector.shape_cast %37 : vector<1x128xf32> to vector<1x1x128xf32>
      tpu.vector_store %arg3[%c0_16, %c3, %c0_17], %40 {strides = array<i32>} : memref<1x4x128xf32, #tpu.memory_space<vmem>>, vector<1x1x128xf32>,
    } else {
    }
    return
  }
  func.func @transform_0(%arg0: i32) -> (i32, i32) {
    %c0_i32 = arith.constant 0 : i32
    %c0_i32_0 = arith.constant 0 : i32
    return %arg0, %c0_i32 : i32, i32
  }
  func.func @transform_1(%arg0: i32) -> (i32, i32) {
    %c0_i32 = arith.constant 0 : i32
    %c0_i32_0 = arith.constant 0 : i32
    return %arg0, %c0_i32 : i32, i32
  }
  func.func @transform_2(%arg0: i32) -> (i32, i32, i32) {
    %c0_i32 = arith.constant 0 : i32
    %c0_i32_0 = arith.constant 0 : i32
    %c0_i32_1 = arith.constant 0 : i32
    return %arg0, %c0_i32, %c0_i32_0 : i32, i32, i32
  }
}

</mosaic_0001>

<llo_original>
// kernel: _compute_batch_sums.1
$region0: #{_compute_batch_sums.1}
  #allocation0 [shape = 'u32[]', space=smem, size = 0x4, offset = 0x4, fixed_abs, tag = 'smem constant byte address 0x4 - core index']
  #allocation1 [shape = 'u32[144,128]{1,0:T(1,128)}', space=vmem, size = 0x12000, scoped, tag = 'internal scratch']
  %s0 = inlined_call_operand.hbm [shape: f32[20,128], index: 0, kind: input, shape index: {}]
  %s1 = inlined_call_operand.hbm [shape: f32[20,128], index: 1, kind: input, shape index: {}]
  %s2 = inlined_call_operand.vmem [shape: f32[2,4,128], index: 2, kind: output, shape index: {}]
  %s3 = sld [smem:[#allocation0]]
  $region57: #{_compute_batch_sums.1} parent=0
    _
  %s5 = ssub.s32 1, %s3
  %s6 = scalar_select 0, %s5, %s3
  $region1: #{_compute_batch_sums.1} parent=0
    #allocation2 [shape = 'u8[16384]{0}', space=vmem, size = 0x4000, scoped, tag = 'input window, operand 0']
    #allocation3 [shape = 's32[2]{0}', space=sflag, size = 0x8, scoped, tag = 'scoped memory for _compute_batch_sums.1']
    #allocation4 [shape = 'u8[16384]{0}', space=vmem, size = 0x4000, scoped, tag = 'input window, operand 1']
    #allocation5 [shape = 's32[2]{0}', space=sflag, size = 0x8, scoped, tag = 'scoped memory for _compute_batch_sums.1']
    %7 = vsyncpa [#allocation3], 0
    %s8 = scalar_lea.sflag [#allocation3], 1
    %9 = vsyncpa %s8, 0
    %10 = vsyncpa [#allocation5], 0
    %s11 = scalar_lea.sflag [#allocation5], 1
    %12 = vsyncpa %s11, 0
    loop: start=0, step=1, limit=4
    $region2: #{_compute_batch_sums.1} parent=1 // loop_pre_header
      _
    $region3: #{_compute_batch_sums.1} parent=1 // loop_header
      %s14 = sphi 0, %s18
      %p15 = scmp.ge.s32.totalorder %s14, 4
      %s24 = sphi 0, %s26
      %s27 = sphi 0, %s24
      %s28 = sphi 0, %s27
      %s44 = sphi 0, %s28
      %s50 = sphi 0, %s52
      %s53 = sphi 0, %s50
      %s54 = sphi 0, %s53
      %s70 = sphi 0, %s54
      %s76 = sphi 0, %s78
      %s79 = sphi 0, %s76
      %s80 = sphi 0, %s79
      %s96 = sphi 0, %s80
    $region4: #{_compute_batch_sums.1} parent=1 // loop_header_branch
      %17 = sbr.rel (%p15) target = $region8
    $region5: #{_compute_batch_sums.1} parent=1 // loop_body
      %s19 = ssub.s32 %s14, 1
      %s20 = ssub.s32 %s14, 2
      %s21 = sadd.s32 %s14, 1
      %s22 = ssub.s32 %s14, %s21
      %p23 = scmp.eq.s32.totalorder %s22, 0
      %s25 = sadd.s32 %s24, 1
      %s26 = scalar_select %p23, %s24, %s25
      %p29 = pneg %p23
      %p30 = scmp.eq.s32.totalorder %s14, 1
      %p31 = por %p29, %p30
      %p32 = scmp.ne.s32.totalorder %s24, %s27
      %p33 = scmp.eq.s32.totalorder %s14, 0
      %p34 = por %p32, %p33
      %p35 = scmp.ne.s32.totalorder %s24, %s27
      %p36 = scmp.eq.s32.totalorder %s19, 1
      %p37 = por %p35, %p36
      %p38 = scmp.ne.s32.totalorder %s27, %s28
      %p39 = scmp.eq.s32.totalorder %s19, 0
      %p40 = por %p38, %p39
      %p41 = scmp.ne.s32.totalorder %s27, %s28
      %p42 = scmp.eq.s32.totalorder %s20, 1
      %p43 = por %p41, %p42
      %p45 = scmp.ne.s32.totalorder %s28, %s44
      %p46 = scmp.eq.s32.totalorder %s20, 0
      %p47 = por %p45, %p46
      %s48 = ssub.s32 %s14, %s21
      %p49 = scmp.eq.s32.totalorder %s48, 0
      %s51 = sadd.s32 %s50, 1
      %s52 = scalar_select %p49, %s50, %s51
      %p55 = pneg %p49
      %p56 = scmp.eq.s32.totalorder %s14, 1
      %p57 = por %p55, %p56
      %p58 = scmp.ne.s32.totalorder %s50, %s53
      %p59 = scmp.eq.s32.totalorder %s14, 0
      %p60 = por %p58, %p59
      %p61 = scmp.ne.s32.totalorder %s50, %s53
      %p62 = scmp.eq.s32.totalorder %s19, 1
      %p63 = por %p61, %p62
      %p64 = scmp.ne.s32.totalorder %s53, %s54
      %p65 = scmp.eq.s32.totalorder %s19, 0
      %p66 = por %p64, %p65
      %p67 = scmp.ne.s32.totalorder %s53, %s54
      %p68 = scmp.eq.s32.totalorder %s20, 1
      %p69 = por %p67, %p68
      %p71 = scmp.ne.s32.totalorder %s54, %s70
      %p72 = scmp.eq.s32.totalorder %s20, 0
      %p73 = por %p71, %p72
      %s74 = ssub.s32 %s14, %s21
      %p75 = scmp.eq.s32.totalorder %s74, 0
      %s77 = sadd.s32 %s76, 1
      %s78 = scalar_select %p75, %s76, %s77
      %p81 = pneg %p75
      %p82 = scmp.eq.s32.totalorder %s14, 1
      %p83 = por %p81, %p82
      %p84 = scmp.ne.s32.totalorder %s76, %s79
      %p85 = scmp.eq.s32.totalorder %s14, 0
      %p86 = por %p84, %p85
      %p87 = scmp.ne.s32.totalorder %s76, %s79
      %p88 = scmp.eq.s32.totalorder %s19, 1
      %p89 = por %p87, %p88
      %p90 = scmp.ne.s32.totalorder %s79, %s80
      %p91 = scmp.eq.s32.totalorder %s19, 0
      %p92 = por %p90, %p91
      %p93 = scmp.ne.s32.totalorder %s79, %s80
      %p94 = scmp.eq.s32.totalorder %s20, 1
      %p95 = por %p93, %p94
      %p97 = scmp.ne.s32.totalorder %s80, %s96
      %p98 = scmp.eq.s32.totalorder %s20, 0
      %p99 = por %p97, %p98
      %p100 = scmp.le.s32.totalorder 1, %s14
      %p101 = scmp.lt.s32.totalorder %s14, 3
      %p102 = pnand %p100, %p101
      %p103 = pneg %p102
      // Predicated region
      $region9: #{_compute_batch_sums.1} parent=5 // pred_check
        _
      $region10: #{_compute_batch_sums.1} parent=5 // pred_check_branch
        %105 = sbr.rel (%p102) target = $region12
      $region11: #{_compute_batch_sums.1} parent=5 // pred_region
        %s106 = ssub.s32 %s14, 1
      $region12: #{_compute_batch_sums.1} parent=5 // pred_fallthru
        _
      %p107 = scmp.lt.s32.totalorder %s14, 2
      // Predicated region
      $region13: #{_compute_batch_sums.1} parent=5 // pred_check
        %p108 = pneg %p107
      $region14: #{_compute_batch_sums.1} parent=5 // pred_check_branch
        %110 = sbr.rel (%p108) target = $region16
      $region15: #{_compute_batch_sums.1} parent=5 // pred_region
        // Predicated region
        $region17: #{_compute_batch_sums.1} parent=15 // pred_check
          %p111 = pneg %p34
        $region18: #{_compute_batch_sums.1} parent=15 // pred_check_branch
          %113 = sbr.rel (%p111) target = $region20
        $region19: #{_compute_batch_sums.1} parent=15 // pred_region
          %s114 = sand.u32 %s24, 1
          %s115 = scalar_lea.sflag [#allocation3], %s114
          %s116 = sand.u32 %s24, 1
          %s117 = smul.addr %s116, 16
          %s118 = scalar_lea.vmem [#allocation2], %s117
          %s119 = smul.u32 2, %s14
          %s120 = ssub.s32 3, %s119
          %p121 = scmp.lt.s32.totalorder %s120, 2
          %s122 = scalar_select %p121, %s120, 2
          %s123 = smul.u32 128, %s122
          %s125 = ssub.s32 256, %s123
          %126 = vsyncadd %s115, %s125
          %p127 = scmp.ne.s32.totalorder 0, %s123
          %s128 = smul.addr %s119, 128
          %s129 = scalar_lea.hbm %s0, %s128
          %s130 = smul.u32 8, %s122
          %s131 = sshll.u32 %s118, 4
          %s132 = int_to_ptr.vmem [resolvable:$true] %s131
          %s133 = sshll.u32 %s130, 4
          %137 = dma.hbm_to_vmem [thread:$0]  (%p127), %s129, %s133, %s132, %s115, 128, 128, 8
        $region20: #{_compute_batch_sums.1} parent=15 // pred_fallthru
          _
        // Predicated region
        $region21: #{_compute_batch_sums.1} parent=15 // pred_check
          %p138 = pneg %p60
        $region22: #{_compute_batch_sums.1} parent=15 // pred_check_branch
          %140 = sbr.rel (%p138) target = $region24
        $region23: #{_compute_batch_sums.1} parent=15 // pred_region
          %s141 = sand.u32 %s50, 1
          %s142 = scalar_lea.sflag [#allocation5], %s141
          %s143 = sand.u32 %s50, 1
          %s144 = smul.addr %s143, 16
          %s145 = scalar_lea.vmem [#allocation4], %s144
          %s146 = smul.u32 2, %s14
          %s147 = ssub.s32 3, %s146
          %p148 = scmp.lt.s32.totalorder %s147, 2
          %s149 = scalar_select %p148, %s147, 2
          %s150 = smul.u32 128, %s149
          %s152 = ssub.s32 256, %s150
          %153 = vsyncadd %s142, %s152
          %p154 = scmp.ne.s32.totalorder 0, %s150
          %s155 = smul.addr %s146, 128
          %s156 = scalar_lea.hbm %s1, %s155
          %s157 = smul.u32 8, %s149
          %s158 = sshll.u32 %s145, 4
          %s159 = int_to_ptr.vmem [resolvable:$true] %s158
          %s160 = sshll.u32 %s157, 4
          %164 = dma.hbm_to_vmem [thread:$0]  (%p154), %s156, %s160, %s159, %s142, 128, 128, 8
        $region24: #{_compute_batch_sums.1} parent=15 // pred_fallthru
          _
      $region16: #{_compute_batch_sums.1} parent=5 // pred_fallthru
        _
      %p165 = scmp.le.s32.totalorder 1, %s14
      %p166 = scmp.lt.s32.totalorder %s14, 3
      %p167 = pnand %p165, %p166
      %p168 = pneg %p167
      // Predicated region
      $region25: #{_compute_batch_sums.1} parent=5 // pred_check
        _
      $region26: #{_compute_batch_sums.1} parent=5 // pred_check_branch
        %170 = sbr.rel (%p167) target = $region28
      $region27: #{_compute_batch_sums.1} parent=5 // pred_region
        %s171 = ssub.s32 %s14, 1
        %s172 = sand.u32 %s27, 1
        %s173 = scalar_lea.sflag [#allocation3], %s172
        %s174 = sand.u32 %s27, 1
        %s175 = smul.addr %s174, 16
        %s176 = scalar_lea.vmem [#allocation2], %s175
        // Predicated region
        $region29: #{_compute_batch_sums.1} parent=27 // pred_check
          %p177 = pneg %p40
        $region30: #{_compute_batch_sums.1} parent=27 // pred_check_branch
          %179 = sbr.rel (%p177) target = $region32
        $region31: #{_compute_batch_sums.1} parent=27 // pred_region
          %180 = dma.done %s173, 256
        $region32: #{_compute_batch_sums.1} parent=27 // pred_fallthru
          _
        %s181 = sand.u32 %s53, 1
        %s182 = scalar_lea.sflag [#allocation5], %s181
        %s183 = sand.u32 %s53, 1
        %s184 = smul.addr %s183, 16
        %s185 = scalar_lea.vmem [#allocation4], %s184
        // Predicated region
        $region33: #{_compute_batch_sums.1} parent=27 // pred_check
          %p186 = pneg %p66
        $region34: #{_compute_batch_sums.1} parent=27 // pred_check_branch
          %188 = sbr.rel (%p186) target = $region36
        $region35: #{_compute_batch_sums.1} parent=27 // pred_region
          %189 = dma.done %s182, 256
        $region36: #{_compute_batch_sums.1} parent=27 // pred_fallthru
          _
        %s190 = sand.u32 %s27, 1
        %s191 = scalar_lea.sflag [#allocation3], %s190
        %s192 = sand.u32 %s27, 1
        %s193 = smul.addr %s192, 16
        %s194 = scalar_lea.vmem [#allocation2], %s193
        %p195 = pneg %p40
        %p196 = pneg %p37
        %s197 = sand.u32 %s53, 1
        %s198 = scalar_lea.sflag [#allocation5], %s197
        %s199 = sand.u32 %s53, 1
        %s200 = smul.addr %s199, 16
        %s201 = scalar_lea.vmem [#allocation4], %s200
        %p202 = pneg %p66
        %p203 = pneg %p63
        %p204 = pneg %p92
        %p205 = pneg %p89
        %p206 = scmp.lt.s32.totalorder %s19, 1
        %s207 = scalar_select %p206, %s19, 1
        %s208 = smul.addr %s207, 4
        %s209 = scalar_lea.vmem %s2, %s208
        %s210 = smul.u32 2, %s19
        %s211 = ssub.s32 3, %s210
        %p212 = scmp.lt.s32.totalorder %s211, 2
        %s213 = scalar_select %p212, %s211, 2
        %s214 = smul.u32 128, %s213
        %s215 = smul.u32 2, %s19
        %s216 = ssub.s32 3, %s215
        %p217 = scmp.lt.s32.totalorder %s216, 2
        %s218 = scalar_select %p217, %s216, 2
        %s219 = smul.u32 128, %s218
        %p220 = scmp.lt.s32.totalorder %s19, 1
        %s221 = scalar_select %p220, %s19, 1
        %s222 = smul.addr %s221, 4
        %s223 = scalar_lea.vmem %s2, %s222
        %p224 = scmp.eq.s32.totalorder %s19, 1
        %p225 = scmp.ne.s32.totalorder %s19, 1
        // Predicated region
        $region37: #{_compute_batch_sums.1} parent=27 // pred_check
          %p226 = pneg %p225
        $region38: #{_compute_batch_sums.1} parent=27 // pred_check_branch
          %228 = sbr.rel (%p226) target = $region40
        $region39: #{_compute_batch_sums.1} parent=27 // pred_region
          %v229 = vld [vmem:[%s176] sm:$0xff]
          %v230 = vld [vmem:[%s176 + $0x8] sm:$0xff]
          %v231 = vld [vmem:[%s185] sm:$0xff]
          %v232 = vld [vmem:[%s185 + $0x8] sm:$0xff]
          %v233 = vadd.f32 %v229, %v230
          %v234 = vrot.slane %v233, 4
          %v235 = vadd.f32 %v233, %v234
          %v236 = vrot.slane %v235, 2
          %v237 = vadd.f32 %v235, %v236
          %v238 = vrot.slane %v237, 1
          %v239 = vadd.f32 %v237, %v238
          %240 = vst [vmem:[%s223] sm:$0x1] %v239
          %v241 = vmul.f32 %v229, %v229
          %v242 = vmul.f32 %v230, %v230
          %v243 = vadd.f32 %v241, %v242
          %v244 = vrot.slane %v243, 4
          %v245 = vadd.f32 %v243, %v244
          %v246 = vrot.slane %v245, 2
          %v247 = vadd.f32 %v245, %v246
          %v248 = vrot.slane %v247, 1
          %v249 = vadd.f32 %v247, %v248
          %250 = vst [vmem:[%s223 + $0x1] sm:$0x1] %v249
          %v251 = vadd.f32 %v231, %v232
          %v252 = vrot.slane %v251, 4
          %v253 = vadd.f32 %v251, %v252
          %v254 = vrot.slane %v253, 2
          %v255 = vadd.f32 %v253, %v254
          %v256 = vrot.slane %v255, 1
          %v257 = vadd.f32 %v255, %v256
          %258 = vst [vmem:[%s223 + $0x2] sm:$0x1] %v257
          %v259 = vmul.f32 %v231, %v231
          %v260 = vmul.f32 %v232, %v232
          %v261 = vadd.f32 %v259, %v260
          %v262 = vrot.slane %v261, 4
          %v263 = vadd.f32 %v261, %v262
          %v264 = vrot.slane %v263, 2
          %v265 = vadd.f32 %v263, %v264
          %v266 = vrot.slane %v265, 1
          %v267 = vadd.f32 %v265, %v266
          %268 = vst [vmem:[%s223 + $0x3] sm:$0x1] %v267
        $region40: #{_compute_batch_sums.1} parent=27 // pred_fallthru
          _
        // Predicated region
        $region41: #{_compute_batch_sums.1} parent=27 // pred_check
          %p269 = pneg %p224
        $region42: #{_compute_batch_sums.1} parent=27 // pred_check_branch
          %271 = sbr.rel (%p269) target = $region44
        $region43: #{_compute_batch_sums.1} parent=27 // pred_region
          %v272 = vlaneseq
          %v273 = vshrl.u32 %v272, 7
          %v274 = vadd.s32 %v273, 8
          %vm275 = vcmp.lt.s32.totalorder %v273, 4
          %vm276 = vcmp.lt.s32.totalorder %v274, 4
          %v277 = vld [vmem:[%s176] sm:$0xff]
          %v278 = vld [vmem:[%s176 + $0x8] sm:$0xff]
          %v279 = vsel %vm275, 1, 0
          %v280 = vsel %vm276, 1, 0
          %vm281 = vcmp.eq.s32.totalorder %v279, 1
          %vm282 = vcmp.eq.s32.totalorder %v280, 1
          %v283 = vsel %vm281, %v277, 0.0
          %v284 = vsel %vm282, %v278, 0.0
          %v285 = vld [vmem:[%s185] sm:$0xff]
          %v286 = vld [vmem:[%s185 + $0x8] sm:$0xff]
          %v287 = vsel %vm281, %v285, 0.0
          %v288 = vsel %vm282, %v286, 0.0
          %v289 = vadd.f32 %v283, %v284
          %v290 = vrot.slane %v289, 4
          %v291 = vadd.f32 %v289, %v290
          %v292 = vrot.slane %v291, 2
          %v293 = vadd.f32 %v291, %v292
          %v294 = vrot.slane %v293, 1
          %v295 = vadd.f32 %v293, %v294
          %296 = vst [vmem:[%s223] sm:$0x1] %v295
          %v297 = vmul.f32 %v283, %v283
          %v298 = vmul.f32 %v284, %v284
          %v299 = vadd.f32 %v297, %v298
          %v300 = vrot.slane %v299, 4
          %v301 = vadd.f32 %v299, %v300
          %v302 = vrot.slane %v301, 2
          %v303 = vadd.f32 %v301, %v302
          %v304 = vrot.slane %v303, 1
          %v305 = vadd.f32 %v303, %v304
          %306 = vst [vmem:[%s223 + $0x1] sm:$0x1] %v305
          %v307 = vadd.f32 %v287, %v288
          %v308 = vrot.slane %v307, 4
          %v309 = vadd.f32 %v307, %v308
          %v310 = vrot.slane %v309, 2
          %v311 = vadd.f32 %v309, %v310
          %v312 = vrot.slane %v311, 1
          %v313 = vadd.f32 %v311, %v312
          %314 = vst [vmem:[%s223 + $0x2] sm:$0x1] %v313
          %v315 = vmul.f32 %v287, %v287
          %v316 = vmul.f32 %v288, %v288
          %v317 = vadd.f32 %v315, %v316
          %v318 = vrot.slane %v317, 4
          %v319 = vadd.f32 %v317, %v318
          %v320 = vrot.slane %v319, 2
          %v321 = vadd.f32 %v319, %v320
          %v322 = vrot.slane %v321, 1
          %v323 = vadd.f32 %v321, %v322
          %324 = vst [vmem:[%s223 + $0x3] sm:$0x1] %v323
        $region44: #{_compute_batch_sums.1} parent=27 // pred_fallthru
          _
        %p325 = scmp.lt.s32.totalorder %s19, 1
        %s326 = scalar_select %p325, %s19, 1
        %s327 = smul.addr %s326, 4
        %s328 = scalar_lea.vmem %s2, %s327
        // Predicated region
        $region45: #{_compute_batch_sums.1} parent=27 // pred_check
          %p329 = pneg %p89
        $region46: #{_compute_batch_sums.1} parent=27 // pred_check_branch
          %331 = sbr.rel (%p329) target = $region48
        $region47: #{_compute_batch_sums.1} parent=27 // pred_region
          _
        $region48: #{_compute_batch_sums.1} parent=27 // pred_fallthru
          _
      $region28: #{_compute_batch_sums.1} parent=5 // pred_fallthru
        _
      %p332 = scmp.le.s32.totalorder 2, %s14
      // Predicated region
      $region49: #{_compute_batch_sums.1} parent=5 // pred_check
        %p333 = pneg %p332
      $region50: #{_compute_batch_sums.1} parent=5 // pred_check_branch
        %335 = sbr.rel (%p333) target = $region52
      $region51: #{_compute_batch_sums.1} parent=5 // pred_region
        %s336 = ssub.s32 %s14, 2
        // Predicated region
        $region53: #{_compute_batch_sums.1} parent=51 // pred_check
          %p337 = pneg %p95
        $region54: #{_compute_batch_sums.1} parent=51 // pred_check_branch
          %339 = sbr.rel (%p337) target = $region56
        $region55: #{_compute_batch_sums.1} parent=51 // pred_region
          %p340 = scmp.lt.s32.totalorder %s20, 1
          %s341 = scalar_select %p340, %s20, 1
          %s342 = smul.addr %s341, 4
          %s343 = scalar_lea.vmem %s2, %s342
        $region56: #{_compute_batch_sums.1} parent=51 // pred_fallthru
          _
      $region52: #{_compute_batch_sums.1} parent=5 // pred_fallthru
        _
    $region6: #{_compute_batch_sums.1} parent=1 // loop_footer
      %s18 = sadd.s32 1, %s14
    $region7: #{_compute_batch_sums.1} parent=1 // loop_footer_branch
      %13 = sbr.rel target = $region3
    $region8: #{_compute_batch_sums.1} parent=1 // loop_exit
      _
    %344 = vsyncpa [#allocation3], 1
    %s345 = scalar_lea.sflag [#allocation3], 1
    %346 = vsyncpa %s345, 1
    %347 = vsyncpa [#allocation5], 1
    %s348 = scalar_lea.sflag [#allocation5], 1
    %349 = vsyncpa %s348, 1

</llo_original>
